<compile_context>
chip_gen: v6e
topology: v6e:2x2x1
jax: 0.10.0
libtpu: 0.0.40
codegen_flags: <defaults>
</compile_context>

<pallas_src>
import functools

import jax
import jax.numpy as jnp
from jax.experimental import pallas as pl
from jax.experimental.pallas import tpu as pltpu


def _round_up(x, m):
    return ((x + m - 1) // m) * m


def linear_kernel(x_ref, w_ref, b_ref, o_ref):
    # x_ref : (tm, tk) f32   activation tile (cast to bf16 on the VPU below)
    # w_ref : (tk, tn) bf16  weight tile, pre-transposed to (IN, OUT) at init
    # b_ref : (1,  tn) f32   bias tile
    # o_ref : (tm, tn) f32   output tile == accumulator; its block index does
    #                        not depend on k, so it stays resident in VMEM for
    #                        the whole K reduction and is written back once.
    k = pl.program_id(2)

    @pl.when(k == 0)
    def _init():
        # Seed the resident output tile with the bias -> bias applied exactly
        # once per output tile, no finalize pass and no scratch accumulator.
        o_ref[...] = jnp.broadcast_to(b_ref[...], o_ref.shape)

    o_ref[...] += jnp.dot(
        x_ref[...].astype(jnp.bfloat16),   # cast in-kernel; VPU has slack
        w_ref[...],
        preferred_element_type=jnp.float32,
    )


def prepare_linear_params(weight, bias, *, tm_max=512, tn_max=1024, tk_max=2048):
    """One-time parameter prep (call at init, NOT per forward).

    weight: (out_features, in_features) f32  (PyTorch layout)
    bias:   (out_features,)             f32

    Returns (w_t, b_row, tiles):
      w_t   : (Kp, Np) bf16  -- weight transposed to (IN, OUT), padded, cast once
      b_row : (1,  Np) f32   -- bias row, padded
      tiles : dict with the static tile sizes to pass to pallas_linear
    """
    OUT, IN = weight.shape
    assert bias.shape == (OUT,)

    Np0 = _round_up(OUT, 128)
    Kp0 = _round_up(IN, 128)
    tn = min(tn_max, Np0)
    tk = min(tk_max, Kp0)

    # Megacore (v7x has 2 TensorCores): give the N parallel axis >= 2 blocks
    # when the layer is wide enough, so small-batch calls still use both cores.
    if Np0 // tn < 2 and Np0 >= 256:
        tn = _round_up(-(-Np0 // 2), 128)

    # Keep the double-buffered footprint comfortably inside v7x's 64 MiB VMEM
    # (worst-case tm = tm_max). f32 x, bf16 w, f32 bias row, f32 output tile.
    budget = 40 * 1024 * 1024

    def _footprint(tm_, tn_, tk_):
        return 2 * (tm_ * tk_ * 4 + tk_ * tn_ * 2 + tn_ * 4 + tm_ * tn_ * 4)

    while _footprint(tm_max, tn, tk) > budget and tk > 512:
        tk = max(512, _round_up(tk // 2, 128))
    while _footprint(tm_max, tn, tk) > budget and tn > 256:
        tn = max(256, _round_up(tn // 2, 128))

    Np = _round_up(OUT, tn)
    Kp = _round_up(IN, tk)

    # Transpose + cast + pad ONCE (amortized across every forward call).
    w_t = weight.T.astype(jnp.bfloat16)                      # (IN, OUT)
    w_t = jnp.pad(w_t, ((0, Kp - IN), (0, Np - OUT)))        # zeros are inert
    b_row = bias.astype(jnp.float32).reshape(1, OUT)
    b_row = jnp.pad(b_row, ((0, 0), (0, Np - OUT)))

    return w_t, b_row, dict(tm_max=tm_max, tn=tn, tk=tk, out_features=OUT)


@functools.partial(jax.jit, static_argnames=("tm_max", "tn", "tk", "out_features"))
def pallas_linear(x, w_t, b_row, *, tm_max, tn, tk, out_features):
    """y = x @ W^T + b with pre-prepared params (see prepare_linear_params).

    x: (B, in_features) f32.  Returns (B, out_features) f32.
    """
    B, IN = x.shape
    Kp, Np = w_t.shape
    assert Kp % tk == 0 and Np % tn == 0 and Kp >= IN

    # tm: multiple of 16 for bf16 sublane packing of the cast activation tile.
    tm = min(tm_max, _round_up(B, 16))
    Mp = _round_up(B, tm)

    x_p = x
    if Mp != B or Kp != IN:
        x_p = jnp.pad(x, ((0, Mp - B), (0, Kp - IN)))

    grid = (Mp // tm, Np // tn, Kp // tk)

    cost = pl.CostEstimate(
        flops=2 * Mp * Np * Kp,
        transcendentals=0,
        bytes_accessed=(
            Mp * Kp * 4 * (Np // tn)      # x re-read once per N block
            + Kp * Np * 2 * (Mp // tm)    # weight re-read once per M block
            + Np * 4 * (Mp // tm)         # bias
            + Mp * Np * 4                 # output writeback
        ),
    )

    footprint = 2 * (tm * tk * 4 + tk * tn * 2 + tn * 4 + tm * tn * 4)
    vmem_limit = min(60 * 1024 * 1024,
                     max(32 * 1024 * 1024, footprint + (8 << 20)))

    # TODO(synk): if profiling shows DMA still exposed at these tile sizes, add
    # pipeline_mode=pl.Buffered(3) on the x/weight BlockSpecs and sweep.
    y_p = pl.pallas_call(
        linear_kernel,
        out_shape=jax.ShapeDtypeStruct((Mp, Np), jnp.float32),
        grid_spec=pltpu.PrefetchScalarGridSpec(
            num_scalar_prefetch=0,
            grid=grid,
            in_specs=[
                pl.BlockSpec((tm, tk), lambda i, j, k: (i, k)),   # x (f32)
                pl.BlockSpec((tk, tn), lambda i, j, k: (k, j)),   # W^T (bf16)
                pl.BlockSpec((1, tn), lambda i, j, k: (0, j)),    # bias (f32)
            ],
            out_specs=pl.BlockSpec((tm, tn), lambda i, j, k: (i, j)),
        ),
        compiler_params=pltpu.CompilerParams(
            dimension_semantics=("parallel", "parallel", "arbitrary"),
            vmem_limit_bytes=vmem_limit,
        ),
        cost_estimate=cost,
    )(x_p, w_t, b_row)

    # Slice off alignment padding.
    return y_p[:B, :out_features]


def init_linear_params(key, in_features, out_features):
    """Matches the PyTorch module:
       weight: kaiming_normal_ (fan_in, gain sqrt(2)) -> std = sqrt(2/in_features)
       bias:   nn.Linear default uniform(-1/sqrt(in), 1/sqrt(in))
    """
    kw, kb = jax.random.split(key)
    std = (2.0 / in_features) ** 0.5
    weight = std * jax.random.normal(kw, (out_features, in_features), jnp.float32)
    bound = 1.0 / (in_features ** 0.5)
    bias = jax.random.uniform(kb, (out_features,), jnp.float32,
                              minval=-bound, maxval=bound)
    return weight, bias


if __name__ == "__main__":
    key = jax.random.PRNGKey(0)
    k_x, k_p = jax.random.split(key)

    # Small deterministic example (the Pallas path is intended for the large
    # GAN projection layers; this just exercises correctness).
    batch, in_features, out_features = 8, 32, 64
    x = jax.random.normal(k_x, (batch, in_features), jnp.float32)
    weight, bias = init_linear_params(k_p, in_features, out_features)

    # One-time parameter prep (transpose + bf16 cast + pad), then forward.
    w_t, b_row, tiles = prepare_linear_params(weight, bias)
    y = pallas_linear(x, w_t, b_row, **tiles)
    y = jax.block_until_ready(y)
    assert y.shape == (batch, out_features)

    # Reference with the identical bf16 MXU feed + f32 accumulation.
    y_ref = jnp.dot(x.astype(jnp.bfloat16), weight.T.astype(jnp.bfloat16),
                    preferred_element_type=jnp.float32) + bias
    assert jnp.allclose(y, y_ref, atol=1e-4, rtol=1e-4)

    # Loose sanity check against full-precision nn.Linear math.
    y_f32 = x @ weight.T + bias
    assert jnp.allclose(y, y_f32, atol=3e-2, rtol=3e-2)

    print("KERNEL_OK")
</pallas_src>

<mosaic_0001>
module attributes {stable_mosaic.version = 11 : i64} {
  func.func @linear_kernel(%arg0: i32, %arg1: i32, %arg2: i32, %arg3: memref<16x128xf32, #tpu.memory_space<vmem>>, %arg4: memref<128x128xbf16, #tpu.memory_space<vmem>>, %arg5: memref<1x128xf32, #tpu.memory_space<vmem>>, %arg6: memref<16x128xf32, #tpu.memory_space<vmem>>) attributes {dimension_semantics = [#tpu.dimension_semantics<parallel>, #tpu.dimension_semantics<parallel>, #tpu.dimension_semantics<arbitrary>], iteration_bounds = array<i64: 1, 1, 1>, scalar_prefetch = 0 : i64, scratch_operands = 0 : i64, tpu.core_type = #tpu.core_type<tc>, window_params = [{transform_indices = @transform_0, window_bounds = array<i64: 16, 128>}, {transform_indices = @transform_1, window_bounds = array<i64: 128, 128>}, {transform_indices = @transform_2, window_bounds = array<i64: 1, 128>}, {transform_indices = @transform_3, window_bounds = array<i64: 16, 128>}]} {
    %c0_i32 = arith.constant 0 : i32
    %0 = arith.cmpi eq, %arg2, %c0_i32 : i32
    %1 = arith.extui %0 : i1 to i32
    %c0_i32_0 = arith.constant 0 : i32
    %2 = arith.cmpi ne, %1, %c0_i32_0 : i32
    scf.if %2 {
      %c0_8 = arith.constant 0 : index
      %c0_9 = arith.constant 0 : index
      %10 = vector.load %arg5[%c0_8, %c0_9] : memref<1x128xf32, #tpu.memory_space<vmem>>, vector<1x128xf32>
      %11 = vector.shape_cast %10 : vector<1x128xf32> to vector<1x128xf32>
      %12 = vector.broadcast %11 : vector<1x128xf32> to vector<16x128xf32>
      %c0_10 = arith.constant 0 : index
      %c0_11 = arith.constant 0 : index
      %13 = vector.load %arg6[%c0_10, %c0_11] : memref<16x128xf32, #tpu.memory_space<vmem>>, vector<16x128xf32>
      tpu.vector_store %arg6[%c0_10, %c0_11], %12 {strides = array<i32>} : memref<16x128xf32, #tpu.memory_space<vmem>>, vector<16x128xf32>,
    } else {
    }
    %c0 = arith.constant 0 : index
    %c0_1 = arith.constant 0 : index
    %3 = vector.load %arg6[%c0, %c0_1] : memref<16x128xf32, #tpu.memory_space<vmem>>, vector<16x128xf32>
    %c0_2 = arith.constant 0 : index
    %c0_3 = arith.constant 0 : index
    %4 = vector.load %arg3[%c0_2, %c0_3] : memref<16x128xf32, #tpu.memory_space<vmem>>, vector<16x128xf32>
    %5 = arith.truncf %4 : vector<16x128xf32> to vector<16x128xbf16>
    %c0_4 = arith.constant 0 : index
    %c0_5 = arith.constant 0 : index
    %6 = vector.load %arg4[%c0_4, %c0_5] : memref<128x128xbf16, #tpu.memory_space<vmem>>, vector<128x128xbf16>
    %cst = arith.constant dense<0.000000e+00> : vector<16x128xf32>
    %7 = tpu.matmul %5, %6, %cst {dimension_numbers = #tpu.dot_dimension_numbers<[1], [0], [0], [1], [0, 0, 1, 1], [], []>} : vector<16x128xbf16>, vector<128x128xbf16>, vector<16x128xf32> -> vector<16x128xf32>
    %8 = arith.addf %3, %7 : vector<16x128xf32>
    %c0_6 = arith.constant 0 : index
    %c0_7 = arith.constant 0 : index
    %9 = vector.load %arg6[%c0_6, %c0_7] : memref<16x128xf32, #tpu.memory_space<vmem>>, vector<16x128xf32>
    tpu.vector_store %arg6[%c0_6, %c0_7], %8 {strides = array<i32>} : memref<16x128xf32, #tpu.memory_space<vmem>>, vector<16x128xf32>,
    return
  }
  func.func @transform_0(%arg0: i32, %arg1: i32, %arg2: i32) -> (i32, i32) {
    %c0_i32 = arith.constant 0 : i32
    return %arg0, %arg2 : i32, i32
  }
  func.func @transform_1(%arg0: i32, %arg1: i32, %arg2: i32) -> (i32, i32) {
    %c0_i32 = arith.constant 0 : i32
    return %arg2, %arg1 : i32, i32
  }
  func.func @transform_2(%arg0: i32, %arg1: i32, %arg2: i32) -> (i32, i32) {
    %c0_i32 = arith.constant 0 : i32
    %c0_i32_0 = arith.constant 0 : i32
    return %c0_i32, %arg1 : i32, i32
  }
  func.func @transform_3(%arg0: i32, %arg1: i32, %arg2: i32) -> (i32, i32) {
    %c0_i32 = arith.constant 0 : i32
    return %arg0, %arg1 : i32, i32
  }
}

</mosaic_0001>

<llo_original>
// kernel: pallas_linear.1
$region0: #{pallas_linear.1}
  #allocation0 [shape = 'u32[]', space=smem, size = 0x4, offset = 0x4, fixed_abs, tag = 'smem constant byte address 0x4 - core index']
  #allocation1 [shape = 'u32[144,128]{1,0:T(1,128)}', space=vmem, size = 0x12000, scoped, tag = 'internal scratch']
  %s0 = inlined_call_operand.vmem [shape: f32[16,128], index: 0, kind: input, shape index: {}]
  %s1 = inlined_call_operand.hbm [shape: bf16[128,128], index: 1, kind: input, shape index: {}]
  %s2 = inlined_call_operand.vmem [shape: f32[1,128], index: 2, kind: input, shape index: {}]
  %s3 = inlined_call_operand.vmem [shape: f32[16,128], index: 3, kind: output, shape index: {}]
  %s4 = sld [smem:[#allocation0]]
  $region30: #{pallas_linear.1} parent=0
    _
  %s6 = ssub.s32 1, %s4
  %s7 = scalar_select 0, %s6, %s4
  $region1: #{pallas_linear.1} parent=0
    #allocation2 [shape = 'u8[32768]{0}', space=vmem, size = 0x8000, scoped, tag = 'input window, operand 1, single buffered']
    #allocation3 [shape = 's32[1]{0}', space=sflag, size = 0x4, scoped, tag = 'scoped memory for pallas_linear.1']
    %8 = vsyncpa [#allocation3], 0
    // Predicated region
    $region2: #{pallas_linear.1} parent=1 // pred_check
      _
    $region3: #{pallas_linear.1} parent=1 // pred_check_branch
      %10 = sbr.rel (0) target = $region5
    $region4: #{pallas_linear.1} parent=1 // pred_region
      _
    $region5: #{pallas_linear.1} parent=1 // pred_fallthru
      _
    // Predicated region
    $region6: #{pallas_linear.1} parent=1 // pred_check
      _
    $region7: #{pallas_linear.1} parent=1 // pred_check_branch
      %12 = sbr.rel (0) target = $region9
    $region8: #{pallas_linear.1} parent=1 // pred_region
      %s14 = ssub.s32 1024, 1024
      %15 = vsyncadd [#allocation3], %s14
      %s16 = sshll.u32 [#allocation2], 4
      %s17 = int_to_ptr.vmem [resolvable:$true] %s16
      %22 = dma.hbm_to_vmem [thread:$0]  %s1, 1024, %s17, [#allocation3], 64, 64, 4
    $region9: #{pallas_linear.1} parent=1 // pred_fallthru
      _
    // Predicated region
    $region10: #{pallas_linear.1} parent=1 // pred_check
      _
    $region11: #{pallas_linear.1} parent=1 // pred_check_branch
      %24 = sbr.rel (0) target = $region13
    $region12: #{pallas_linear.1} parent=1 // pred_region
      _
    $region13: #{pallas_linear.1} parent=1 // pred_fallthru
      _
    // Predicated region
    $region14: #{pallas_linear.1} parent=1 // pred_check
      _
    $region15: #{pallas_linear.1} parent=1 // pred_check_branch
      %26 = sbr.rel (0) target = $region17
    $region16: #{pallas_linear.1} parent=1 // pred_region
      %27 = dma.done [#allocation3], 1024
    $region17: #{pallas_linear.1} parent=1 // pred_fallthru
      _
    %p29 = scmp.eq.s32.totalorder 0, 0
    // Predicated region
    $region18: #{pallas_linear.1} parent=1 // pred_check
      %p30 = pneg %p29
    $region19: #{pallas_linear.1} parent=1 // pred_check_branch
      %32 = sbr.rel (%p30) target = $region21
    $region20: #{pallas_linear.1} parent=1 // pred_region
      %v33 = vld [vmem:[%s2] sm:$0x1]
      %v35 = vlaneseq
      %v36 = vshrl.u32 %v35, 7
      %v37 = vsub.s32 0, %v36
      %v38 = vrot.slane %v33, %v37
      %40 = vst [vmem:[%s3] sm:$0xff] %v38
      %41 = vst [vmem:[%s3 + $0x8] sm:$0xff] %v38
    $region21: #{pallas_linear.1} parent=1 // pred_fallthru
      _
    %v42 = vld [vmem:[%s3] sm:$0xff]
    %v43 = vld [vmem:[%s3 + $0x8] sm:$0xff]
    %v44 = vld [vmem:[%s0] sm:$0xff]
    %v45 = vld [vmem:[%s0 + $0x8] sm:$0xff]
    %v46 = vpack.c.bf16 %v45, %v44
    %v47 = vld [vmem:[#allocation2] sm:$0xf]
    %v48 = vld [vmem:[#allocation2 + $0x4] sm:$0xf]
    %v49 = vld [vmem:[#allocation2 + $0x8] sm:$0xf]
    %v50 = vld [vmem:[#allocation2 + $0xc] sm:$0xf]
    %v51 = vld [vmem:[#allocation2 + $0x10] sm:$0xf]
    %v52 = vld [vmem:[#allocation2 + $0x14] sm:$0xf]
    %v53 = vld [vmem:[#allocation2 + $0x18] sm:$0xf]
    %v54 = vld [vmem:[#allocation2 + $0x1c] sm:$0xf]
    %v55 = vld [vmem:[#allocation2 + $0x20] sm:$0xf]
    %v56 = vld [vmem:[#allocation2 + $0x24] sm:$0xf]
    %v57 = vld [vmem:[#allocation2 + $0x28] sm:$0xf]
    %v58 = vld [vmem:[#allocation2 + $0x2c] sm:$0xf]
    %v59 = vld [vmem:[#allocation2 + $0x30] sm:$0xf]
    %v60 = vld [vmem:[#allocation2 + $0x34] sm:$0xf]
    %v61 = vld [vmem:[#allocation2 + $0x38] sm:$0xf]
    %v62 = vld [vmem:[#allocation2 + $0x3c] sm:$0xf]
    %v79 = vunpack.c.l.b16 %v47
    %v80 = vunpack.c.l.b16 %v48
    %v81 = vunpack.c.l.b16 %v49
    %v82 = vunpack.c.l.b16 %v50
    %v83 = vunpack.c.l.b16 %v51
    %v84 = vunpack.c.l.b16 %v52
    %v85 = vunpack.c.l.b16 %v53
    %v86 = vunpack.c.l.b16 %v54
    %v87 = vunpack.c.l.b16 %v55
    %v88 = vunpack.c.l.b16 %v56
    %v89 = vunpack.c.l.b16 %v57
    %v90 = vunpack.c.l.b16 %v58
    %v91 = vunpack.c.l.b16 %v59
    %v92 = vunpack.c.l.b16 %v60
    %v93 = vunpack.c.l.b16 %v61
    %v94 = vunpack.c.l.b16 %v62
    %v95 = vpack.c.b16 %v80, %v79
    %v96 = vpack.c.b16 %v82, %v81
    %v97 = vpack.c.b16 %v84, %v83
    %v98 = vpack.c.b16 %v86, %v85
    %v99 = vpack.c.b16 %v88, %v87
    %v100 = vpack.c.b16 %v90, %v89
    %v101 = vpack.c.b16 %v92, %v91
    %v102 = vpack.c.b16 %v94, %v93
    %111 = vmatprep.subr.bf16.mxu0 0
    %112 = vmatpush1.bf16.msra.mxu0 %v102
    %113 = vmatprep.subr.bf16.mxu0 0
    %114 = vmatpush1.bf16.msra.mxu0 %v101
    %115 = vmatprep.subr.bf16.mxu0 0
    %116 = vmatpush1.bf16.msra.mxu0 %v100
    %117 = vmatprep.subr.bf16.mxu0 0
    %118 = vmatpush1.bf16.msra.mxu0 %v99
    %119 = vmatprep.subr.bf16.mxu0 0
    %120 = vmatpush1.bf16.msra.mxu0 %v98
    %121 = vmatprep.subr.bf16.mxu0 0
    %122 = vmatpush1.bf16.msra.mxu0 %v97
    %123 = vmatprep.subr.bf16.mxu0 0
    %124 = vmatpush1.bf16.msra.mxu0 %v96
    %125 = vmatprep.subr.bf16.mxu0 0
    %126 = vmatpush1.bf16.msra.mxu0 %v95
    %127 = vmatprep.subr.bf16.mxu0 0
    %128 = vmatpush2.bf16.msra.mxu0 0
    %129 = vmatprep.subr.bf16.mxu0 0
    %130 = vmatpush2.bf16.msra.mxu0 0
    %131 = vmatprep.subr.bf16.mxu0 0
    %132 = vmatpush2.bf16.msra.mxu0 0
    %133 = vmatprep.subr.bf16.mxu0 0
    %134 = vmatpush2.bf16.msra.mxu0 0
    %135 = vmatprep.subr.bf16.mxu0 0
    %136 = vmatpush2.bf16.msra.mxu0 0
    %137 = vmatprep.subr.bf16.mxu0 0
    %138 = vmatpush2.bf16.msra.mxu0 0
    %139 = vmatprep.subr.bf16.mxu0 0
    %140 = vmatpush2.bf16.msra.mxu0 0
    %141 = vmatprep.subr.bf16.mxu0 0
    %142 = vmatpush2.bf16.msra.mxu0 0
    %143 = vmatprep.mubr.bf16.mxu0 0
    %144 = vmatmul.mubr.bf16.gmra.mxu0 %v46
    %v145 = vpop.f32.mrf.mxu0
    %v146 = vadd.f32 0.0, %v145
    %v147 = vpop.f32.mrf.mxu0
    %v148 = vpop.f32.mrf.mxu0
    %v149 = vadd.f32 0.0, %v148
    %v150 = vpop.f32.mrf.mxu0
    %151 = vdwg.mxu0
    %v152 = vadd.f32 %v42, %v146
    %v153 = vadd.f32 %v43, %v149
    %154 = vst [vmem:[%s3] sm:$0xff] %v152
    %155 = vst [vmem:[%s3 + $0x8] sm:$0xff] %v153
    // Predicated region
    $region22: #{pallas_linear.1} parent=1 // pred_check
      _
    $region23: #{pallas_linear.1} parent=1 // pred_check_branch
      %157 = sbr.rel (0) target = $region25
    $region24: #{pallas_linear.1} parent=1 // pred_region
      _
    $region25: #{pallas_linear.1} parent=1 // pred_fallthru
      _
    // Predicated region
    $region26: #{pallas_linear.1} parent=1 // pred_check
      _
    $region27: #{pallas_linear.1} parent=1 // pred_check_branch
      %159 = sbr.rel (0) target = $region29
    $region28: #{pallas_linear.1} parent=1 // pred_region
      _
    $region29: #{pallas_linear.1} parent=1 // pred_fallthru
      _
    %160 = vsyncpa [#allocation3], 1

</llo_original>
